<compile_context>
chip_gen: v7x
topology: tpu7x:2x2x1
jax: 0.10.0
libtpu: 0.0.40
codegen_flags: <defaults>
</compile_context>

<pallas_src>
import functools

import jax
import jax.numpy as jnp
from jax.experimental import pallas as pl
from jax.experimental.pallas import tpu as pltpu


def _conv_kernel(x_ref, w_ref, b_ref, o_ref, xcols_ref, *,
                 kh_sz, kw_sz, img_w, cp):
    """x_ref:     (Cp, B*H*W)        lane-dense input, channels on sublanes
       w_ref:     (Cout, KH*KW*Cp)   the model's x*2 already folded in
       b_ref:     (Cout, 1)          bias column (broadcasts along lanes)
       o_ref:     (Cout, B*H*W)      lane-dense output slab
       xcols_ref: (KH*KW*Cp, B*H*W)  VMEM scratch im2col buffer."""
    lanes = x_ref.shape[-1]
    x = x_ref[...]                                    # (Cp, B*HW)

    # Build the im2col matrix with XLU rotates; each tap is stored directly
    # into the scratch at an 8-sublane-aligned offset (no temporaries/concat).
    t = 0
    for kh in range(kh_sz):
        for kw in range(kw_sz):
            off = kh * img_w + kw
            tap = x if off == 0 else pltpu.roll(x, shift=lanes - off, axis=1)
            xcols_ref[pl.ds(t * cp, cp), :] = tap
            t += 1

    # Single MXU push: (Cout, K) x (K, B*HW); bias add; one unmasked
    # 512-lane store.
    out = jnp.dot(w_ref[...], xcols_ref[...],
                  preferred_element_type=jnp.float32)
    o_ref[...] = (out + b_ref[...]).astype(o_ref.dtype)


def prepare_conv_params(w_oihw, bias):
    """One-time parameter prep (hoisted out of the per-call jit path):
    fold the model's `x * 2` into the weight (conv is linear in x), relayout
    OIHW -> (Cout, kh, kw, ci), zero-pad ci to a full 8-sublane tile, and
    flatten to (Cout, KH*KW*Cp)."""
    c_out, c_in, kh, kw = w_oihw.shape
    cp = ((c_in + 7) // 8) * 8
    w_k = jnp.transpose(w_oihw, (0, 2, 3, 1)) * 2.0      # (Cout, KH, KW, Cin)
    if cp != c_in:
        w_k = jnp.pad(w_k, ((0, 0), (0, 0), (0, 0), (0, cp - c_in)))
    w_mat = w_k.reshape(c_out, kh * kw * cp)
    b_col = bias.reshape(c_out, 1)
    return w_mat, b_col


@functools.partial(jax.jit, static_argnames=("kh", "kw"))
def conv_model_forward(x_nchw, w_mat, b_col, *, kh=3, kw=3):
    """Forward of ConvModel: (x * 2) -> Conv2d(kernel=3, stride=1, VALID)."""
    B, c_in, H, W = x_nchw.shape
    c_out = w_mat.shape[0]
    cp = w_mat.shape[1] // (kh * kw)
    HW = H * W
    Ho, Wo = H - kh + 1, W - kw + 1
    assert kh <= H and kw <= W

    # (B, Cin, H, W) -> (Cp, B*H*W): channels on sublanes (padded to 8),
    # batch + spatial flattened onto 512 lanes.  One small fused XLA op.
    x_cm = jnp.transpose(x_nchw.reshape(B, c_in, HW),
                         (1, 0, 2)).reshape(c_in, B * HW)
    if cp != c_in:
        x_cm = jnp.pad(x_cm, ((0, cp - c_in), (0, 0)))

    out_flat = pl.pallas_call(
        functools.partial(_conv_kernel, kh_sz=kh, kw_sz=kw, img_w=W, cp=cp),
        out_shape=jax.ShapeDtypeStruct((c_out, B * HW), x_nchw.dtype),
        grid=(1,),                                    # single step, no overhead
        in_specs=[
            pl.BlockSpec((cp, B * HW), lambda i: (0, 0)),
            pl.BlockSpec((c_out, kh * kw * cp), lambda i: (0, 0)),
            pl.BlockSpec((c_out, 1), lambda i: (0, 0)),
        ],
        out_specs=pl.BlockSpec((c_out, B * HW), lambda i: (0, 0)),
        scratch_shapes=[pltpu.VMEM((kh * kw * cp, B * HW), jnp.float32)],
    )(x_cm, w_mat, b_col)

    # (Cout, B*H*W) -> (B, Cout, Ho, Wo): one small fused XLA op.  The VALID
    # slice also discards every output pixel whose taps wrapped around the
    # circular roll (invariant documented at the top of this file).
    out = jnp.transpose(out_flat.reshape(c_out, B, H, W), (1, 0, 2, 3))
    return out[:, :, :Ho, :Wo]


if __name__ == "__main__":
    key = jax.random.PRNGKey(0)
    k_x, k_w, k_b = jax.random.split(key, 3)

    B, C_IN, C_OUT, H, W = 2, 4, 8, 16, 16
    x = jax.random.normal(k_x, (B, C_IN, H, W), dtype=jnp.float32)
    # deterministic parameter init (shapes match nn.Conv2d(c_in, c_out, 3))
    weight = jax.random.normal(k_w, (C_OUT, C_IN, 3, 3), dtype=jnp.float32) * 0.1
    bias = jax.random.normal(k_b, (C_OUT,), dtype=jnp.float32) * 0.1

    # init-time prep (runs once, outside the per-call jit path)
    w_mat, b_col = jax.block_until_ready(prepare_conv_params(weight, bias))

    out = conv_model_forward(x, w_mat, b_col)
    out = jax.block_until_ready(out)

    # reference check against XLA's conv (same semantics as nn.Conv2d)
    ref = jax.lax.conv_general_dilated(
        x * 2.0, weight, window_strides=(1, 1), padding="VALID",
        dimension_numbers=("NCHW", "OIHW", "NCHW"),
    ) + bias[None, :, None, None]
    assert out.shape == (B, C_OUT, H - 2, W - 2)
    assert jnp.allclose(out, ref, atol=1e-4, rtol=1e-4)

    print("KERNEL_OK")
</pallas_src>

<mosaic_0001>
module attributes {stable_mosaic.version = 11 : i64} {
  func.func @_conv_kernel(%arg0: i32, %arg1: memref<8x512xf32, #tpu.memory_space<vmem>>, %arg2: memref<8x72xf32, #tpu.memory_space<vmem>>, %arg3: memref<8x1xf32, #tpu.memory_space<vmem>>, %arg4: memref<8x512xf32, #tpu.memory_space<vmem>>, %arg5: memref<72x512xf32, #tpu.memory_space<vmem>>) attributes {dimension_semantics = [#tpu.dimension_semantics<arbitrary>], iteration_bounds = array<i64: 1>, scalar_prefetch = 0 : i64, scratch_operands = 1 : i64, tpu.core_type = #tpu.core_type<tc>, window_params = [{pipeline_mode = #tpu.pipeline_mode<synchronous>, transform_indices = @transform_0, window_bounds = array<i64: 8, 512>}, {pipeline_mode = #tpu.pipeline_mode<synchronous>, transform_indices = @transform_1, window_bounds = array<i64: 8, 72>}, {pipeline_mode = #tpu.pipeline_mode<synchronous>, transform_indices = @transform_2, window_bounds = array<i64: 8, 1>}, {pipeline_mode = #tpu.pipeline_mode<synchronous>, transform_indices = @transform_3, window_bounds = array<i64: 8, 512>}]} {
    %c0 = arith.constant 0 : index
    %c0_0 = arith.constant 0 : index
    %0 = vector.load %arg1[%c0, %c0_0] : memref<8x512xf32, #tpu.memory_space<vmem>>, vector<8x512xf32>
    %c0_1 = arith.constant 0 : index
    %c0_2 = arith.constant 0 : index
    %1 = vector.load %arg5[%c0_1, %c0_2] : memref<72x512xf32, #tpu.memory_space<vmem>>, vector<8x512xf32>
    tpu.vector_store %arg5[%c0_1, %c0_2], %0 {strides = array<i32>} : memref<72x512xf32, #tpu.memory_space<vmem>>, vector<8x512xf32>,
    %c511_i32 = arith.constant 511 : i32
    %2 = tpu.dynamic_rotate %0 by %c511_i32 dim 1 : vector<8x512xf32>, i32 -> vector<8x512xf32>
    %c8 = arith.constant 8 : index
    %c0_3 = arith.constant 0 : index
    %3 = vector.load %arg5[%c8, %c0_3] : memref<72x512xf32, #tpu.memory_space<vmem>>, vector<8x512xf32>
    tpu.vector_store %arg5[%c8, %c0_3], %2 {strides = array<i32>} : memref<72x512xf32, #tpu.memory_space<vmem>>, vector<8x512xf32>,
    %c510_i32 = arith.constant 510 : i32
    %4 = tpu.dynamic_rotate %0 by %c510_i32 dim 1 : vector<8x512xf32>, i32 -> vector<8x512xf32>
    %c16 = arith.constant 16 : index
    %c0_4 = arith.constant 0 : index
    %5 = vector.load %arg5[%c16, %c0_4] : memref<72x512xf32, #tpu.memory_space<vmem>>, vector<8x512xf32>
    tpu.vector_store %arg5[%c16, %c0_4], %4 {strides = array<i32>} : memref<72x512xf32, #tpu.memory_space<vmem>>, vector<8x512xf32>,
    %c496_i32 = arith.constant 496 : i32
    %6 = tpu.dynamic_rotate %0 by %c496_i32 dim 1 : vector<8x512xf32>, i32 -> vector<8x512xf32>
    %c24 = arith.constant 24 : index
    %c0_5 = arith.constant 0 : index
    %7 = vector.load %arg5[%c24, %c0_5] : memref<72x512xf32, #tpu.memory_space<vmem>>, vector<8x512xf32>
    tpu.vector_store %arg5[%c24, %c0_5], %6 {strides = array<i32>} : memref<72x512xf32, #tpu.memory_space<vmem>>, vector<8x512xf32>,
    %c495_i32 = arith.constant 495 : i32
    %8 = tpu.dynamic_rotate %0 by %c495_i32 dim 1 : vector<8x512xf32>, i32 -> vector<8x512xf32>
    %c32 = arith.constant 32 : index
    %c0_6 = arith.constant 0 : index
    %9 = vector.load %arg5[%c32, %c0_6] : memref<72x512xf32, #tpu.memory_space<vmem>>, vector<8x512xf32>
    tpu.vector_store %arg5[%c32, %c0_6], %8 {strides = array<i32>} : memref<72x512xf32, #tpu.memory_space<vmem>>, vector<8x512xf32>,
    %c494_i32 = arith.constant 494 : i32
    %10 = tpu.dynamic_rotate %0 by %c494_i32 dim 1 : vector<8x512xf32>, i32 -> vector<8x512xf32>
    %c40 = arith.constant 40 : index
    %c0_7 = arith.constant 0 : index
    %11 = vector.load %arg5[%c40, %c0_7] : memref<72x512xf32, #tpu.memory_space<vmem>>, vector<8x512xf32>
    tpu.vector_store %arg5[%c40, %c0_7], %10 {strides = array<i32>} : memref<72x512xf32, #tpu.memory_space<vmem>>, vector<8x512xf32>,
    %c480_i32 = arith.constant 480 : i32
    %12 = tpu.dynamic_rotate %0 by %c480_i32 dim 1 : vector<8x512xf32>, i32 -> vector<8x512xf32>
    %c48 = arith.constant 48 : index
    %c0_8 = arith.constant 0 : index
    %13 = vector.load %arg5[%c48, %c0_8] : memref<72x512xf32, #tpu.memory_space<vmem>>, vector<8x512xf32>
    tpu.vector_store %arg5[%c48, %c0_8], %12 {strides = array<i32>} : memref<72x512xf32, #tpu.memory_space<vmem>>, vector<8x512xf32>,
    %c479_i32 = arith.constant 479 : i32
    %14 = tpu.dynamic_rotate %0 by %c479_i32 dim 1 : vector<8x512xf32>, i32 -> vector<8x512xf32>
    %c56 = arith.constant 56 : index
    %c0_9 = arith.constant 0 : index
    %15 = vector.load %arg5[%c56, %c0_9] : memref<72x512xf32, #tpu.memory_space<vmem>>, vector<8x512xf32>
    tpu.vector_store %arg5[%c56, %c0_9], %14 {strides = array<i32>} : memref<72x512xf32, #tpu.memory_space<vmem>>, vector<8x512xf32>,
    %c478_i32 = arith.constant 478 : i32
    %16 = tpu.dynamic_rotate %0 by %c478_i32 dim 1 : vector<8x512xf32>, i32 -> vector<8x512xf32>
    %c64 = arith.constant 64 : index
    %c0_10 = arith.constant 0 : index
    %17 = vector.load %arg5[%c64, %c0_10] : memref<72x512xf32, #tpu.memory_space<vmem>>, vector<8x512xf32>
    tpu.vector_store %arg5[%c64, %c0_10], %16 {strides = array<i32>} : memref<72x512xf32, #tpu.memory_space<vmem>>, vector<8x512xf32>,
    %c0_11 = arith.constant 0 : index
    %c0_12 = arith.constant 0 : index
    %18 = vector.load %arg2[%c0_11, %c0_12] : memref<8x72xf32, #tpu.memory_space<vmem>>, vector<8x72xf32>
    %c0_13 = arith.constant 0 : index
    %c0_14 = arith.constant 0 : index
    %19 = vector.load %arg5[%c0_13, %c0_14] : memref<72x512xf32, #tpu.memory_space<vmem>>, vector<72x512xf32>
    %cst = arith.constant dense<0.000000e+00> : vector<8x512xf32>
    %20 = tpu.matmul %18, %19, %cst {dimension_numbers = #tpu.dot_dimension_numbers<[1], [0], [0], [1], [0, 0, 1, 1], [], []>} : vector<8x72xf32>, vector<72x512xf32>, vector<8x512xf32> -> vector<8x512xf32>
    %c0_15 = arith.constant 0 : index
    %c0_16 = arith.constant 0 : index
    %21 = vector.load %arg3[%c0_15, %c0_16] : memref<8x1xf32, #tpu.memory_space<vmem>>, vector<8x1xf32>
    %22 = vector.broadcast %21 : vector<8x1xf32> to vector<8x512xf32>
    %23 = arith.addf %20, %22 : vector<8x512xf32>
    %c0_17 = arith.constant 0 : index
    %c0_18 = arith.constant 0 : index
    %24 = vector.load %arg4[%c0_17, %c0_18] : memref<8x512xf32, #tpu.memory_space<vmem>>, vector<8x512xf32>
    tpu.vector_store %arg4[%c0_17, %c0_18], %23 {strides = array<i32>} : memref<8x512xf32, #tpu.memory_space<vmem>>, vector<8x512xf32>,
    return
  }
  func.func @transform_0(%arg0: i32) -> (i32, i32) {
    %c0_i32 = arith.constant 0 : i32
    %c0_i32_0 = arith.constant 0 : i32
    %c0_i32_1 = arith.constant 0 : i32
    return %c0_i32, %c0_i32_0 : i32, i32
  }
  func.func @transform_1(%arg0: i32) -> (i32, i32) {
    %c0_i32 = arith.constant 0 : i32
    %c0_i32_0 = arith.constant 0 : i32
    %c0_i32_1 = arith.constant 0 : i32
    return %c0_i32, %c0_i32_0 : i32, i32
  }
  func.func @transform_2(%arg0: i32) -> (i32, i32) {
    %c0_i32 = arith.constant 0 : i32
    %c0_i32_0 = arith.constant 0 : i32
    %c0_i32_1 = arith.constant 0 : i32
    return %c0_i32, %c0_i32_0 : i32, i32
  }
  func.func @transform_3(%arg0: i32) -> (i32, i32) {
    %c0_i32 = arith.constant 0 : i32
    %c0_i32_0 = arith.constant 0 : i32
    %c0_i32_1 = arith.constant 0 : i32
    return %c0_i32, %c0_i32_0 : i32, i32
  }
}

</mosaic_0001>

<llo_original>
// kernel: conv_model_forward.1
$region0: #{conv_model_forward.1}
  #allocation0 [shape = 'u32[]', space=smem, size = 0x4, offset = 0x4, fixed_abs, tag = 'smem constant byte address 0x4 - core index']
  #allocation1 [shape = 'u32[144,128]{1,0:T(1,128)}', space=vmem, size = 0x12000, scoped, tag = 'internal scratch']
  #allocation2 [shape = 'f32[72,512]{1,0:T(8,128)}', space=vmem, size = 0x24000, scoped, tag = 'scratch operand']
  %s0 = inlined_call_operand.vmem [shape: f32[8,512], index: 0, kind: input, shape index: {}]
  %s1 = inlined_call_operand.vmem [shape: f32[8,72], index: 1, kind: input, shape index: {}]
  %s2 = inlined_call_operand.vmem [shape: f32[8,1], index: 2, kind: input, shape index: {}]
  %s3 = inlined_call_operand.vmem [shape: f32[8,512], index: 3, kind: output, shape index: {}]
  %s4 = sld [smem:[#allocation0]]
  $region22: #{conv_model_forward.1} parent=0
    _
  %s6 = ssub.s32 1, %s4
  %s7 = scalar_select 0, %s6, %s4
  // Predicated region
  $region2: #{conv_model_forward.1} parent=0 // pred_check
    _
  $region3: #{conv_model_forward.1} parent=0 // pred_check_branch
    %9 = sbr.rel (0) target = $region5
  $region4: #{conv_model_forward.1} parent=0 // pred_region
    _
  $region5: #{conv_model_forward.1} parent=0 // pred_fallthru
    _
  // Predicated region
  $region6: #{conv_model_forward.1} parent=0 // pred_check
    _
  $region7: #{conv_model_forward.1} parent=0 // pred_check_branch
    %11 = sbr.rel (0) target = $region9
  $region8: #{conv_model_forward.1} parent=0 // pred_region
    _
  $region9: #{conv_model_forward.1} parent=0 // pred_fallthru
    _
  // Predicated region
  $region10: #{conv_model_forward.1} parent=0 // pred_check
    _
  $region11: #{conv_model_forward.1} parent=0 // pred_check_branch
    %13 = sbr.rel (0) target = $region13
  $region12: #{conv_model_forward.1} parent=0 // pred_region
    _
  $region13: #{conv_model_forward.1} parent=0 // pred_fallthru
    _
  %v14 = vld [vmem:[%s0] sm:$0xff]
  %v15 = vld [vmem:[%s0 + $0x8] sm:$0xff]
  %v16 = vld [vmem:[%s0 + $0x10] sm:$0xff]
  %v17 = vld [vmem:[%s0 + $0x18] sm:$0xff]
  %18 = vst [vmem:[#allocation2] sm:$0xff] %v14
  %19 = vst [vmem:[#allocation2 + $0x8] sm:$0xff] %v15
  %20 = vst [vmem:[#allocation2 + $0x10] sm:$0xff] %v16
  %21 = vst [vmem:[#allocation2 + $0x18] sm:$0xff] %v17
  %22 = vrot.lane.b32.xlu0 %v14, 127
  %v23 = vpop.permute.xlu0 %22
  %24 = vrot.lane.b32.xlu0 %v15, 127
  %v25 = vpop.permute.xlu0 %24
  %26 = vrot.lane.b32.xlu0 %v16, 127
  %v27 = vpop.permute.xlu0 %26
  %28 = vrot.lane.b32.xlu0 %v17, 127
  %v29 = vpop.permute.xlu0 %28
  %v30 = vlaneseq
  %v31 = vand.u32 %v30, 127
  %vm32 = vcmp.lt.s32.totalorder %v31, 127
  %v33 = vsel %vm32, %v27, %v29
  %v34 = vsel %vm32, %v25, %v27
  %v35 = vsel %vm32, %v23, %v25
  %v36 = vsel %vm32, %v29, %v23
  %37 = vst [vmem:[#allocation2 + $0x20] sm:$0xff] %v35
  %38 = vst [vmem:[#allocation2 + $0x28] sm:$0xff] %v34
  %39 = vst [vmem:[#allocation2 + $0x30] sm:$0xff] %v33
  %40 = vst [vmem:[#allocation2 + $0x38] sm:$0xff] %v36
  %41 = vrot.lane.b32.xlu0 %v14, 126
  %v42 = vpop.permute.xlu0 %41
  %43 = vrot.lane.b32.xlu0 %v15, 126
  %v44 = vpop.permute.xlu0 %43
  %45 = vrot.lane.b32.xlu0 %v16, 126
  %v46 = vpop.permute.xlu0 %45
  %47 = vrot.lane.b32.xlu0 %v17, 126
  %v48 = vpop.permute.xlu0 %47
  %vm49 = vcmp.lt.s32.totalorder %v31, 126
  %v50 = vsel %vm49, %v46, %v48
  %v51 = vsel %vm49, %v44, %v46
  %v52 = vsel %vm49, %v42, %v44
  %v53 = vsel %vm49, %v48, %v42
  %54 = vst [vmem:[#allocation2 + $0x40] sm:$0xff] %v52
  %55 = vst [vmem:[#allocation2 + $0x48] sm:$0xff] %v51
  %56 = vst [vmem:[#allocation2 + $0x50] sm:$0xff] %v50
  %57 = vst [vmem:[#allocation2 + $0x58] sm:$0xff] %v53
  %58 = vrot.lane.b32.xlu0 %v14, 112
  %v59 = vpop.permute.xlu0 %58
  %60 = vrot.lane.b32.xlu0 %v15, 112
  %v61 = vpop.permute.xlu0 %60
  %62 = vrot.lane.b32.xlu0 %v16, 112
  %v63 = vpop.permute.xlu0 %62
  %64 = vrot.lane.b32.xlu0 %v17, 112
  %v65 = vpop.permute.xlu0 %64
  %vm66 = vcmp.lt.s32.totalorder %v31, 112
  %v67 = vsel %vm66, %v63, %v65
  %v68 = vsel %vm66, %v61, %v63
  %v69 = vsel %vm66, %v59, %v61
  %v70 = vsel %vm66, %v65, %v59
  %71 = vst [vmem:[#allocation2 + $0x60] sm:$0xff] %v69
  %72 = vst [vmem:[#allocation2 + $0x68] sm:$0xff] %v68
  %73 = vst [vmem:[#allocation2 + $0x70] sm:$0xff] %v67
  %74 = vst [vmem:[#allocation2 + $0x78] sm:$0xff] %v70
  %75 = vrot.lane.b32.xlu0 %v14, 111
  %v76 = vpop.permute.xlu0 %75
  %77 = vrot.lane.b32.xlu0 %v15, 111
  %v78 = vpop.permute.xlu0 %77
  %79 = vrot.lane.b32.xlu0 %v16, 111
  %v80 = vpop.permute.xlu0 %79
  %81 = vrot.lane.b32.xlu0 %v17, 111
  %v82 = vpop.permute.xlu0 %81
  %vm83 = vcmp.lt.s32.totalorder %v31, 111
  %v84 = vsel %vm83, %v80, %v82
  %v85 = vsel %vm83, %v78, %v80
  %v86 = vsel %vm83, %v76, %v78
  %v87 = vsel %vm83, %v82, %v76
  %88 = vst [vmem:[#allocation2 + $0x80] sm:$0xff] %v86
  %89 = vst [vmem:[#allocation2 + $0x88] sm:$0xff] %v85
  %90 = vst [vmem:[#allocation2 + $0x90] sm:$0xff] %v84
  %91 = vst [vmem:[#allocation2 + $0x98] sm:$0xff] %v87
  %92 = vrot.lane.b32.xlu0 %v14, 110
  %v93 = vpop.permute.xlu0 %92
  %94 = vrot.lane.b32.xlu0 %v15, 110
  %v95 = vpop.permute.xlu0 %94
  %96 = vrot.lane.b32.xlu0 %v16, 110
  %v97 = vpop.permute.xlu0 %96
  %98 = vrot.lane.b32.xlu0 %v17, 110
  %v99 = vpop.permute.xlu0 %98
  %vm100 = vcmp.lt.s32.totalorder %v31, 110
  %v101 = vsel %vm100, %v97, %v99
  %v102 = vsel %vm100, %v95, %v97
  %v103 = vsel %vm100, %v93, %v95
  %v104 = vsel %vm100, %v99, %v93
  %105 = vst [vmem:[#allocation2 + $0xa0] sm:$0xff] %v103
  %106 = vst [vmem:[#allocation2 + $0xa8] sm:$0xff] %v102
  %107 = vst [vmem:[#allocation2 + $0xb0] sm:$0xff] %v101
  %108 = vst [vmem:[#allocation2 + $0xb8] sm:$0xff] %v104
  %109 = vrot.lane.b32.xlu0 %v14, 96
  %v110 = vpop.permute.xlu0 %109
  %111 = vrot.lane.b32.xlu0 %v15, 96
  %v112 = vpop.permute.xlu0 %111
  %113 = vrot.lane.b32.xlu0 %v16, 96
  %v114 = vpop.permute.xlu0 %113
  %115 = vrot.lane.b32.xlu0 %v17, 96
  %v116 = vpop.permute.xlu0 %115
  %vm117 = vcmp.lt.s32.totalorder %v31, 96
  %v118 = vsel %vm117, %v114, %v116
  %v119 = vsel %vm117, %v112, %v114
  %v120 = vsel %vm117, %v110, %v112
  %v121 = vsel %vm117, %v116, %v110
  %122 = vst [vmem:[#allocation2 + $0xc0] sm:$0xff] %v120
  %123 = vst [vmem:[#allocation2 + $0xc8] sm:$0xff] %v119
  %124 = vst [vmem:[#allocation2 + $0xd0] sm:$0xff] %v118
  %125 = vst [vmem:[#allocation2 + $0xd8] sm:$0xff] %v121
  %126 = vrot.lane.b32.xlu0 %v14, 95
  %v127 = vpop.permute.xlu0 %126
  %128 = vrot.lane.b32.xlu0 %v15, 95
  %v129 = vpop.permute.xlu0 %128
  %130 = vrot.lane.b32.xlu0 %v16, 95
  %v131 = vpop.permute.xlu0 %130
  %132 = vrot.lane.b32.xlu0 %v17, 95
  %v133 = vpop.permute.xlu0 %132
  %vm134 = vcmp.lt.s32.totalorder %v31, 95
  %v135 = vsel %vm134, %v131, %v133
  %v136 = vsel %vm134, %v129, %v131
  %v137 = vsel %vm134, %v127, %v129
  %v138 = vsel %vm134, %v133, %v127
  %139 = vst [vmem:[#allocation2 + $0xe0] sm:$0xff] %v137
  %140 = vst [vmem:[#allocation2 + $0xe8] sm:$0xff] %v136
  %141 = vst [vmem:[#allocation2 + $0xf0] sm:$0xff] %v135
  %142 = vst [vmem:[#allocation2 + $0xf8] sm:$0xff] %v138
  %143 = vrot.lane.b32.xlu0 %v14, 94
  %v144 = vpop.permute.xlu0 %143
  %145 = vrot.lane.b32.xlu0 %v15, 94
  %v146 = vpop.permute.xlu0 %145
  %147 = vrot.lane.b32.xlu0 %v16, 94
  %v148 = vpop.permute.xlu0 %147
  %149 = vrot.lane.b32.xlu0 %v17, 94
  %v150 = vpop.permute.xlu0 %149
  %vm151 = vcmp.lt.s32.totalorder %v31, 94
  %v152 = vsel %vm151, %v148, %v150
  %v153 = vsel %vm151, %v146, %v148
  %v154 = vsel %vm151, %v144, %v146
  %v155 = vsel %vm151, %v150, %v144
  %156 = vst [vmem:[#allocation2 + $0x100] sm:$0xff] %v154
  %157 = vst [vmem:[#allocation2 + $0x108] sm:$0xff] %v153
  %158 = vst [vmem:[#allocation2 + $0x110] sm:$0xff] %v152
  %159 = vst [vmem:[#allocation2 + $0x118] sm:$0xff] %v155
  %v160 = vld [vmem:[%s1] sm:$0xff]
  %v161 = vld [vmem:[#allocation2] sm:$0xff]
  %v162 = vld [vmem:[#allocation2 + $0x8] sm:$0xff]
  %v163 = vld [vmem:[#allocation2 + $0x10] sm:$0xff]
  %v164 = vld [vmem:[#allocation2 + $0x18] sm:$0xff]
  %v165 = vld [vmem:[#allocation2 + $0x20] sm:$0xff]
  %v166 = vld [vmem:[#allocation2 + $0x28] sm:$0xff]
  %v167 = vld [vmem:[#allocation2 + $0x30] sm:$0xff]
  %v168 = vld [vmem:[#allocation2 + $0x38] sm:$0xff]
  %v169 = vld [vmem:[#allocation2 + $0x40] sm:$0xff]
  %v170 = vld [vmem:[#allocation2 + $0x48] sm:$0xff]
  %v171 = vld [vmem:[#allocation2 + $0x50] sm:$0xff]
  %v172 = vld [vmem:[#allocation2 + $0x58] sm:$0xff]
  %v173 = vld [vmem:[#allocation2 + $0x60] sm:$0xff]
  %v174 = vld [vmem:[#allocation2 + $0x68] sm:$0xff]
  %v175 = vld [vmem:[#allocation2 + $0x70] sm:$0xff]
  %v176 = vld [vmem:[#allocation2 + $0x78] sm:$0xff]
  %v177 = vld [vmem:[#allocation2 + $0x80] sm:$0xff]
  %v178 = vld [vmem:[#allocation2 + $0x88] sm:$0xff]
  %v179 = vld [vmem:[#allocation2 + $0x90] sm:$0xff]
  %v180 = vld [vmem:[#allocation2 + $0x98] sm:$0xff]
  %v181 = vld [vmem:[#allocation2 + $0xa0] sm:$0xff]
  %v182 = vld [vmem:[#allocation2 + $0xa8] sm:$0xff]
  %v183 = vld [vmem:[#allocation2 + $0xb0] sm:$0xff]
  %v184 = vld [vmem:[#allocation2 + $0xb8] sm:$0xff]
  %v185 = vld [vmem:[#allocation2 + $0xc0] sm:$0xff]
  %v186 = vld [vmem:[#allocation2 + $0xc8] sm:$0xff]
  %v187 = vld [vmem:[#allocation2 + $0xd0] sm:$0xff]
  %v188 = vld [vmem:[#allocation2 + $0xd8] sm:$0xff]
  %v189 = vld [vmem:[#allocation2 + $0xe0] sm:$0xff]
  %v190 = vld [vmem:[#allocation2 + $0xe8] sm:$0xff]
  %v191 = vld [vmem:[#allocation2 + $0xf0] sm:$0xff]
  %v192 = vld [vmem:[#allocation2 + $0xf8] sm:$0xff]
  %v193 = vld [vmem:[#allocation2 + $0x100] sm:$0xff]
  %v194 = vld [vmem:[#allocation2 + $0x108] sm:$0xff]
  %v195 = vld [vmem:[#allocation2 + $0x110] sm:$0xff]
  %v196 = vld [vmem:[#allocation2 + $0x118] sm:$0xff]
  %v197 = vld [vmem:[%s2] sm:$0xff]
  %199 = vset.pattern.permute.xlu0 0
  %200 = vperm.xlu0 %199, %v197
  %v201 = vpop.permute.xlu0 %200
  %vm203 = vcmask 588800
  %v205 = vsel %vm203, %v160, 0
  %207 = vmatprep.subr.mxu0 %v162
  %208 = vmatpush1.msra.mxu0 %v161
  %209 = vmatprep.subr.mxu0 %v166
  %210 = vmatpush1.msra.mxu0 %v165
  %211 = vmatprep.subr.mxu0 %v170
  %212 = vmatpush1.msra.mxu0 %v169
  %213 = vmatprep.subr.mxu0 %v174
  %214 = vmatpush1.msra.mxu0 %v173
  %215 = vmatprep.subr.mxu0 %v178
  %216 = vmatpush1.msra.mxu0 %v177
  %217 = vmatprep.subr.mxu0 %v182
  %218 = vmatpush1.msra.mxu0 %v181
  %219 = vmatprep.subr.mxu0 %v186
  %220 = vmatpush1.msra.mxu0 %v185
  %221 = vmatprep.subr.mxu0 %v190
  %222 = vmatpush1.msra.mxu0 %v189
  %223 = vmatprep.subr.mxu0 %v194
  %224 = vmatpush1.msra.mxu0 %v193
  %225 = vmatprep.subr.mxu0 0.0
  %226 = vmatpush1.msra.mxu0 0.0
  %227 = vmatprep.subr.mxu0 0.0
  %228 = vmatpush1.msra.mxu0 0.0
  %229 = vmatprep.subr.mxu0 0.0
  %230 = vmatpush1.msra.mxu0 0.0
  %231 = vmatprep.subr.mxu0 0.0
  %232 = vmatpush1.msra.mxu0 0.0
  %233 = vmatprep.subr.mxu0 0.0
  %234 = vmatpush1.msra.mxu0 0.0
  %235 = vmatprep.subr.mxu0 0.0
  %236 = vmatpush1.msra.mxu0 0.0
  %237 = vmatprep.subr.mxu0 0.0
  %238 = vmatpush1.msra.mxu0 0.0
  %239 = vmatprep.subr.mxu0 0.0
  %240 = vmatpush1.msra.mxu0 0.0
  %241 = vmatprep.subr.mxu0 0.0
  %242 = vmatpush1.msra.mxu0 0.0
  %243 = vmatprep.subr.mxu0 0.0
  %244 = vmatpush1.msra.mxu0 0.0
  %245 = vmatprep.subr.mxu0 0.0
  %246 = vmatpush1.msra.mxu0 0.0
  %247 = vmatprep.subr.mxu0 0.0
  %248 = vmatpush1.msra.mxu0 0.0
  %249 = vmatprep.subr.mxu0 0.0
  %250 = vmatpush1.msra.mxu0 0.0
  %251 = vmatprep.subr.mxu0 0.0
  %252 = vmatpush1.msra.mxu0 0.0
  %253 = vmatprep.subr.mxu0 0.0
  %254 = vmatpush1.msra.mxu0 0.0
  %255 = vmatprep.subr.mxu0 0.0
  %256 = vmatpush1.msra.mxu0 0.0
  %257 = vmatprep.subr.mxu0 0.0
  %258 = vmatpush1.msra.mxu0 0.0
  %259 = vmatprep.subr.mxu0 0.0
  %260 = vmatpush1.msra.mxu0 0.0
  %261 = vmatprep.subr.mxu0 0.0
  %262 = vmatpush1.msra.mxu0 0.0
  %263 = vmatprep.subr.mxu0 0.0
  %264 = vmatpush1.msra.mxu0 0.0
  %265 = vmatprep.subr.mxu0 0.0
  %266 = vmatpush1.msra.mxu0 0.0
  %267 = vmatprep.subr.mxu0 0.0
  %268 = vmatpush1.msra.mxu0 0.0
  %269 = vmatprep.subr.mxu0 0.0
  %270 = vmatpush1.msra.mxu0 0.0
  %271 = vmatprep.mubr.f32.mxu0 0.0
  %272 = vmatmul.mubr.f32.gmra.mrb[0].mxu0 %v205
  %v273 = vpop.f32.mrb[0].mxu0
  %v274 = vadd.f32 %v201, %v273
  %v275 = vpop.f32.mrb[0].mxu0
  %v276 = vadd.f32 %v201, %v275
  %277 = vdwg.mxu0
  %278 = vmatprep.subr.mxu0 %v164
  %279 = vmatpush1.msra.mxu0 %v163
  %280 = vmatprep.subr.mxu0 %v168
  %281 = vmatpush1.msra.mxu0 %v167
  %282 = vmatprep.subr.mxu0 %v172
  %283 = vmatpush1.msra.mxu0 %v171
  %284 = vmatprep.subr.mxu0 %v176
  %285 = vmatpush1.msra.mxu0 %v175
  %286 = vmatprep.subr.mxu0 %v180
  %287 = vmatpush1.msra.mxu0 %v179
  %288 = vmatprep.subr.mxu0 %v184
  %289 = vmatpush1.msra.mxu0 %v183
  %290 = vmatprep.subr.mxu0 %v188
  %291 = vmatpush1.msra.mxu0 %v187
  %292 = vmatprep.subr.mxu0 %v192
  %293 = vmatpush1.msra.mxu0 %v191
  %294 = vmatprep.subr.mxu0 %v196
  %295 = vmatpush1.msra.mxu0 %v195
  %296 = vmatprep.subr.mxu0 0.0
  %297 = vmatpush1.msra.mxu0 0.0
  %298 = vmatprep.subr.mxu0 0.0
  %299 = vmatpush1.msra.mxu0 0.0
  %300 = vmatprep.subr.mxu0 0.0
  %301 = vmatpush1.msra.mxu0 0.0
  %302 = vmatprep.subr.mxu0 0.0
  %303 = vmatpush1.msra.mxu0 0.0
  %304 = vmatprep.subr.mxu0 0.0
  %305 = vmatpush1.msra.mxu0 0.0
  %306 = vmatprep.subr.mxu0 0.0
  %307 = vmatpush1.msra.mxu0 0.0
  %308 = vmatprep.subr.mxu0 0.0
  %309 = vmatpush1.msra.mxu0 0.0
  %310 = vmatprep.subr.mxu0 0.0
  %311 = vmatpush1.msra.mxu0 0.0
  %312 = vmatprep.subr.mxu0 0.0
  %313 = vmatpush1.msra.mxu0 0.0
  %314 = vmatprep.subr.mxu0 0.0
  %315 = vmatpush1.msra.mxu0 0.0
  %316 = vmatprep.subr.mxu0 0.0
  %317 = vmatpush1.msra.mxu0 0.0
  %318 = vmatprep.subr.mxu0 0.0
  %319 = vmatpush1.msra.mxu0 0.0
  %320 = vmatprep.subr.mxu0 0.0
  %321 = vmatpush1.msra.mxu0 0.0
  %322 = vmatprep.subr.mxu0 0.0
  %323 = vmatpush1.msra.mxu0 0.0
  %324 = vmatprep.subr.mxu0 0.0
  %325 = vmatpush1.msra.mxu0 0.0
  %326 = vmatprep.subr.mxu0 0.0
  %327 = vmatpush1.msra.mxu0 0.0
  %328 = vmatprep.subr.mxu0 0.0
  %329 = vmatpush1.msra.mxu0 0.0
  %330 = vmatprep.subr.mxu0 0.0
  %331 = vmatpush1.msra.mxu0 0.0
  %332 = vmatprep.subr.mxu0 0.0
  %333 = vmatpush1.msra.mxu0 0.0
  %334 = vmatprep.subr.mxu0 0.0
  %335 = vmatpush1.msra.mxu0 0.0
  %336 = vmatprep.subr.mxu0 0.0
  %337 = vmatpush1.msra.mxu0 0.0
  %338 = vmatprep.subr.mxu0 0.0
  %339 = vmatpush1.msra.mxu0 0.0
  %340 = vmatprep.subr.mxu0 0.0
  %341 = vmatpush1.msra.mxu0 0.0
  %342 = vmatprep.mubr.f32.mxu0 0.0
  %343 = vmatmul.mubr.f32.gmra.mrb[0].mxu0 %v205
  %v344 = vpop.f32.mrb[0].mxu0
  %v345 = vadd.f32 %v201, %v344
  %v346 = vpop.f32.mrb[0].mxu0
  %v347 = vadd.f32 %v201, %v346
  %348 = vdwg.mxu0
  %349 = vst [vmem:[%s3] sm:$0xff] %v274
  %350 = vst [vmem:[%s3 + $0x8] sm:$0xff] %v276
  %351 = vst [vmem:[%s3 + $0x10] sm:$0xff] %v345
  %352 = vst [vmem:[%s3 + $0x18] sm:$0xff] %v347
  // Predicated region
  $region14: #{conv_model_forward.1} parent=0 // pred_check
    _
  $region15: #{conv_model_forward.1} parent=0 // pred_check_branch
    %354 = sbr.rel (0) target = $region17
  $region16: #{conv_model_forward.1} parent=0 // pred_region
    _
  $region17: #{conv_model_forward.1} parent=0 // pred_fallthru
    _
  // Predicated region
  $region18: #{conv_model_forward.1} parent=0 // pred_check
    _
  $region19: #{conv_model_forward.1} parent=0 // pred_check_branch
    %356 = sbr.rel (0) target = $region21
  $region20: #{conv_model_forward.1} parent=0 // pred_region
    _
  $region21: #{conv_model_forward.1} parent=0 // pred_fallthru
    _

</llo_original>
